<compile_context>
chip_gen: v7x
topology: tpu7x:2x2x1
jax: 0.10.0
libtpu: 0.0.40
codegen_flags: <defaults>
</compile_context>

<pallas_src>
import jax
import jax.numpy as jnp
from jax.experimental import pallas as pl
from jax.experimental.pallas import tpu as pltpu


def _sublane_multiple(dtype) -> int:
    """Required row-tile multiple for a dtype's packed sublane layout."""
    return {4: 8, 2: 16, 1: 32}.get(jnp.dtype(dtype).itemsize, 8)


def ventilator_loss(preds, y, u_out, weights, *,
                    target_tile_bytes=4 * 1024 * 1024,
                    split_tile_bytes=1 * 1024 * 1024):
    """sum(|mask(u_out) * (y - preds)|) with the module's masking semantics."""
    # TODO(synk): the PyTorch forward also mutates the caller's u_out in place
    # (mask aliases it); only the returned scalar is reproduced here.
    weights = jnp.asarray(weights, dtype=jnp.float32).reshape(2)

    S = preds.shape[-1]
    p = preds.reshape(-1, S)      # collapse leading dims; last dim kept -> free
    t = y.reshape(-1, S)
    u = u_out.reshape(-1, S)
    B = p.shape[0]

    # Row-tile multiple honouring packed sublane tiling of the narrowest dtype.
    sub = max(_sublane_multiple(p.dtype), _sublane_multiple(t.dtype),
              _sublane_multiple(u.dtype))
    bytes_per_row = S * max(jnp.dtype(p.dtype).itemsize,
                            jnp.dtype(t.dtype).itemsize,
                            jnp.dtype(u.dtype).itemsize)

    rows_rounded = pl.cdiv(B, sub) * sub
    budget_rows = max(sub, (target_tile_bytes // bytes_per_row) // sub * sub)
    tile_rows = min(budget_rows, rows_rounded)
    # v7x: if the whole problem fits one tile but is big enough to be worth
    # sharding, force >= 2 grid steps so both TensorCores stream.
    if tile_rows >= rows_rounded and rows_rounded * bytes_per_row >= 2 * split_tile_bytes:
        tile_rows = max(sub, pl.cdiv(rows_rounded // 2, sub) * sub)

    num_blocks = pl.cdiv(B, tile_rows)
    ragged = num_blocks * tile_rows > B     # static: only then emit the row mask

    def kernel(w_ref, preds_ref, y_ref, u_out_ref, part_ref):
        w0 = w_ref[0]
        w1 = w_ref[1]
        # Reproduce the PyTorch in-place aliasing: the u==0 test runs on the
        # already-modified mask (so w0 == 0.0 would get overwritten by w1).
        u_f = u_out_ref[...].astype(jnp.float32)
        mask = jnp.where(u_f == 1.0, w0, u_f)
        mask = jnp.where(mask == 0.0, w1, mask)

        diff = y_ref[...].astype(jnp.float32) - preds_ref[...].astype(jnp.float32)
        contrib = jnp.abs(mask * diff)                       # (tile_rows, S) f32

        if ragged:
            # Rows past B in the edge block hold unspecified data; select out
            # their contribution after computing it (NaNs cannot leak through).
            row = (pl.program_id(0) * tile_rows
                   + jax.lax.broadcasted_iota(jnp.int32, contrib.shape, 0))
            contrib = jnp.where(row < B, contrib, 0.0)

        # Sublane-group fold: (tile_rows, S) -> (tile_rows//8, 8, S) is a pure
        # view of the tiled layout; the axis-0 sum is plain VPU vreg adds.
        part_ref[...] = contrib.reshape(tile_rows // 8, 8, S).sum(axis=0)

    n_elems = B * S
    cost = pl.CostEstimate(
        flops=6 * n_elems,
        transcendentals=0,
        bytes_accessed=int(p.nbytes + t.nbytes + u.nbytes + num_blocks * 8 * S * 4),
    )

    partials = pl.pallas_call(
        kernel,
        out_shape=jax.ShapeDtypeStruct((num_blocks * 8, S), jnp.float32),
        grid_spec=pltpu.PrefetchScalarGridSpec(
            num_scalar_prefetch=0,
            grid=(num_blocks,),
            in_specs=[
                pl.BlockSpec(memory_space=pltpu.MemorySpace.SMEM),  # loss weights
                pl.BlockSpec((tile_rows, S), lambda i: (i, 0)),     # preds
                pl.BlockSpec((tile_rows, S), lambda i: (i, 0)),     # y
                pl.BlockSpec((tile_rows, S), lambda i: (i, 0)),     # u_out
            ],
            out_specs=pl.BlockSpec((8, S), lambda i: (i, 0)),
        ),
        compiler_params=pltpu.CompilerParams(
            # Each block writes its own output tile -> fully parallel grid
            # (lets v7x shard across both TensorCores; no-op on v5e/v6e).
            dimension_semantics=("parallel",),
            vmem_limit_bytes=40 * 1024 * 1024,
        ),
        cost_estimate=cost,
    )(weights, p, t, u)

    # Tiny final cross-lane reduce of the per-block partials.
    return jnp.sum(partials)


def ventilator_loss_ref(preds, y, u_out, weights):
    """Pure-JAX reference mirroring the PyTorch in-place semantics (f32 math)."""
    p = preds.astype(jnp.float32)
    t = y.astype(jnp.float32)
    mask = u_out.astype(jnp.float32)
    mask = jnp.where(mask == 1.0, weights[0], mask)
    mask = jnp.where(mask == 0.0, weights[1], mask)
    return jnp.sum(jnp.abs(mask * (t - p)))


if __name__ == "__main__":
    # Deterministic "parameters" of the module (self.loss_w in __init__).
    loss_w = jnp.array([0.7, 1.3], dtype=jnp.float32)

    # Small shapes consistent with the forward: (batch, seq). S=80 matches the
    # real ventilator data; B=13 is deliberately NOT a multiple of 8 so the
    # ragged-edge row-masking path is exercised.
    B, S = 13, 80
    key = jax.random.PRNGKey(0)
    k1, k2, k3 = jax.random.split(key, 3)
    preds = jax.random.normal(k1, (B, S), dtype=jnp.float32)
    y = jax.random.normal(k2, (B, S), dtype=jnp.float32)
    # u_out is a 0/1 indicator stored as float (as in the ventilator dataset).
    u_out = jax.random.bernoulli(k3, p=0.4, shape=(B, S)).astype(jnp.float32)

    ref = ventilator_loss_ref(preds, y, u_out, loss_w)

    # Default (single tile, ragged edge) path.
    loss = jax.block_until_ready(ventilator_loss(preds, y, u_out, loss_w))
    assert jnp.allclose(loss, ref, rtol=1e-5, atol=1e-5), (loss, ref)

    # Tiny tile budget -> multi-block grid + ragged last block.
    loss_multi = jax.block_until_ready(
        ventilator_loss(preds, y, u_out, loss_w, target_tile_bytes=8 * S * 4)
    )
    assert jnp.allclose(loss_multi, ref, rtol=1e-5, atol=1e-5), (loss_multi, ref)

    # Native bf16 preds/y streamed without any wrapper-side up-cast
    # (exercises the packed-sublane row-tile multiple of 16 + in-kernel cast).
    preds_bf = preds.astype(jnp.bfloat16)
    y_bf = y.astype(jnp.bfloat16)
    ref_bf = ventilator_loss_ref(preds_bf, y_bf, u_out, loss_w)
    loss_bf = jax.block_until_ready(ventilator_loss(preds_bf, y_bf, u_out, loss_w))
    assert jnp.allclose(loss_bf, ref_bf, rtol=1e-5, atol=1e-5), (loss_bf, ref_bf)

    print("KERNEL_OK")
</pallas_src>

<mosaic_0001>
module attributes {stable_mosaic.version = 11 : i64} {
  func.func @kernel(%arg0: i32, %arg1: memref<2xf32, #tpu.memory_space<smem>>, %arg2: memref<16x80xf32, #tpu.memory_space<vmem>>, %arg3: memref<16x80xf32, #tpu.memory_space<vmem>>, %arg4: memref<16x80xf32, #tpu.memory_space<vmem>>, %arg5: memref<8x80xf32, #tpu.memory_space<vmem>>) attributes {dimension_semantics = [#tpu.dimension_semantics<parallel>], iteration_bounds = array<i64: 1>, scalar_prefetch = 0 : i64, scratch_operands = 0 : i64, tpu.core_type = #tpu.core_type<tc>, window_params = [{transform_indices = @transform_0, window_bounds = array<i64: 2>}, {transform_indices = @transform_1, window_bounds = array<i64: 16, 80>}, {transform_indices = @transform_2, window_bounds = array<i64: 16, 80>}, {transform_indices = @transform_3, window_bounds = array<i64: 16, 80>}, {transform_indices = @transform_4, window_bounds = array<i64: 8, 80>}]} {
    %c0 = arith.constant 0 : index
    %0 = memref.load %arg1[%c0] : memref<2xf32, #tpu.memory_space<smem>>
    %c1 = arith.constant 1 : index
    %1 = memref.load %arg1[%c1] : memref<2xf32, #tpu.memory_space<smem>>
    %c0_0 = arith.constant 0 : index
    %c0_1 = arith.constant 0 : index
    %2 = vector.load %arg4[%c0_0, %c0_1] : memref<16x80xf32, #tpu.memory_space<vmem>>, vector<16x80xf32>
    %cst = arith.constant 1.000000e+00 : f32
    %3 = vector.broadcast %cst : f32 to vector<16x80xf32>
    %4 = arith.cmpf oeq, %2, %3 : vector<16x80xf32>
    %5 = vector.broadcast %0 : f32 to vector<16x80xf32>
    %6 = arith.select %4, %5, %2 : vector<16x80xi1>, vector<16x80xf32>
    %cst_2 = arith.constant 0.000000e+00 : f32
    %7 = vector.broadcast %cst_2 : f32 to vector<16x80xf32>
    %8 = arith.cmpf oeq, %6, %7 : vector<16x80xf32>
    %9 = vector.broadcast %1 : f32 to vector<16x80xf32>
    %10 = arith.select %8, %9, %6 : vector<16x80xi1>, vector<16x80xf32>
    %c0_3 = arith.constant 0 : index
    %c0_4 = arith.constant 0 : index
    %11 = vector.load %arg3[%c0_3, %c0_4] : memref<16x80xf32, #tpu.memory_space<vmem>>, vector<16x80xf32>
    %c0_5 = arith.constant 0 : index
    %c0_6 = arith.constant 0 : index
    %12 = vector.load %arg2[%c0_5, %c0_6] : memref<16x80xf32, #tpu.memory_space<vmem>>, vector<16x80xf32>
    %13 = arith.subf %11, %12 : vector<16x80xf32>
    %14 = arith.mulf %10, %13 : vector<16x80xf32>
    %15 = math.absf %14 : vector<16x80xf32>
    %c16_i32 = arith.constant 16 : i32
    %16 = arith.muli %arg0, %c16_i32 : i32
    %17 = tpu.iota {dimensions = array<i32: 0>} : vector<16x80xi32>
    %18 = vector.broadcast %16 : i32 to vector<16x80xi32>
    %19 = arith.addi %18, %17 : vector<16x80xi32>
    %c13_i32 = arith.constant 13 : i32
    %20 = vector.broadcast %c13_i32 : i32 to vector<16x80xi32>
    %21 = arith.cmpi slt, %19, %20 : vector<16x80xi32>
    %cst_7 = arith.constant 0.000000e+00 : f32
    %22 = vector.broadcast %cst_7 : f32 to vector<16x80xf32>
    %23 = arith.select %21, %15, %22 : vector<16x80xi1>, vector<16x80xf32>
    %24 = vector.shape_cast %23 : vector<16x80xf32> to vector<2x8x80xf32>
    %cst_8 = arith.constant dense<0.000000e+00> : vector<8x80xf32>
    %25 = vector.multi_reduction <add>, %24, %cst_8 [0] : vector<2x8x80xf32> to vector<8x80xf32>
    %c0_9 = arith.constant 0 : index
    %c0_10 = arith.constant 0 : index
    %26 = vector.load %arg5[%c0_9, %c0_10] : memref<8x80xf32, #tpu.memory_space<vmem>>, vector<8x80xf32>
    tpu.vector_store %arg5[%c0_9, %c0_10], %25 {strides = array<i32>} : memref<8x80xf32, #tpu.memory_space<vmem>>, vector<8x80xf32>,
    return
  }
  func.func @transform_0(%arg0: i32) -> i32 {
    %c0_i32 = arith.constant 0 : i32
    %c0_i32_0 = arith.constant 0 : i32
    return %c0_i32 : i32
  }
  func.func @transform_1(%arg0: i32) -> (i32, i32) {
    %c0_i32 = arith.constant 0 : i32
    %c0_i32_0 = arith.constant 0 : i32
    return %arg0, %c0_i32 : i32, i32
  }
  func.func @transform_2(%arg0: i32) -> (i32, i32) {
    %c0_i32 = arith.constant 0 : i32
    %c0_i32_0 = arith.constant 0 : i32
    return %arg0, %c0_i32 : i32, i32
  }
  func.func @transform_3(%arg0: i32) -> (i32, i32) {
    %c0_i32 = arith.constant 0 : i32
    %c0_i32_0 = arith.constant 0 : i32
    return %arg0, %c0_i32 : i32, i32
  }
  func.func @transform_4(%arg0: i32) -> (i32, i32) {
    %c0_i32 = arith.constant 0 : i32
    %c0_i32_0 = arith.constant 0 : i32
    return %arg0, %c0_i32 : i32, i32
  }
}

</mosaic_0001>

<llo_original>
// kernel: tpu_custom_call.1
$region0: #{tpu_custom_call.1}
  #allocation0 [shape = 'u32[]', space=smem, size = 0x4, offset = 0x4, fixed_abs, tag = 'smem constant byte address 0x4 - core index']
  #allocation1 [shape = 'u32[144,128]{1,0:T(1,128)}', space=vmem, size = 0x12000, scoped, tag = 'internal scratch']
  %s0 = inlined_call_operand.hbm [shape: f32[2], index: 0, kind: input, shape index: {}]
  %s1 = inlined_call_operand.hbm [shape: f32[13,80], index: 1, kind: input, shape index: {}]
  %s2 = inlined_call_operand.hbm [shape: f32[13,80], index: 2, kind: input, shape index: {}]
  %s3 = inlined_call_operand.hbm [shape: f32[13,80], index: 3, kind: input, shape index: {}]
  %s4 = inlined_call_operand.hbm [shape: f32[8,80], index: 4, kind: output, shape index: {}]
  %s5 = sld [smem:[#allocation0]]
  $region42: #{tpu_custom_call.1} parent=0
    _
  %s7 = ssub.s32 1, %s5
  %s8 = scalar_select 0, %s7, %s5
  $region1: #{tpu_custom_call.1} parent=0
    #allocation2 [shape = 'u8[512]{0}', space=smem, size = 0x200, scoped, tag = 'input window, operand 0, single buffered']
    #allocation3 [shape = 's32[1]{0}', space=sflag, size = 0x4, scoped, tag = 'scoped memory for tpu_custom_call.1']
    #allocation4 [shape = 's32[1]{0}', space=sflag, size = 0x4, scoped, tag = 'scoped memory for tpu_custom_call.1']
    #allocation5 [shape = 's32[1]{0}', space=sflag, size = 0x4, scoped, tag = 'scoped memory for tpu_custom_call.1']
    #allocation6 [shape = 'u8[8192]{0}', space=vmem, size = 0x2000, scoped, tag = 'input window, operand 1, single buffered']
    #allocation7 [shape = 'u8[8192]{0}', space=vmem, size = 0x2000, scoped, tag = 'input window, operand 2, single buffered']
    #allocation8 [shape = 's32[1]{0}', space=sflag, size = 0x4, scoped, tag = 'scoped memory for tpu_custom_call.1']
    #allocation9 [shape = 'u8[8192]{0}', space=vmem, size = 0x2000, scoped, tag = 'input window, operand 3, single buffered']
    #allocation10 [shape = 'u8[4096]{0}', space=vmem, size = 0x1000, scoped, tag = 'output window, operand 0, single buffered']
    %9 = vsyncpa [#allocation5], 0
    %10 = vsyncpa [#allocation3], 0
    %11 = vsyncpa [#allocation8], 0
    %12 = vsyncpa [#allocation4], 0
    // Predicated region
    $region2: #{tpu_custom_call.1} parent=1 // pred_check
      _
    $region3: #{tpu_custom_call.1} parent=1 // pred_check_branch
      %14 = sbr.rel (0) target = $region5
    $region4: #{tpu_custom_call.1} parent=1 // pred_region
      %s16 = ssub.s32 16, 16
      %17 = vsyncadd [#allocation5], %s16
      %20 = dma.hbm_to_smem %s0, 16, [#allocation2], [#allocation5]
    $region5: #{tpu_custom_call.1} parent=1 // pred_fallthru
      _
    // Predicated region
    $region6: #{tpu_custom_call.1} parent=1 // pred_check
      _
    $region7: #{tpu_custom_call.1} parent=1 // pred_check_branch
      %22 = sbr.rel (0) target = $region9
    $region8: #{tpu_custom_call.1} parent=1 // pred_region
      %s24 = ssub.s32 256, 256
      %25 = vsyncadd [#allocation3], %s24
      %s26 = sshll.u32 [#allocation6], 4
      %s27 = int_to_ptr.vmem [resolvable:$true] %s26
      %32 = dma.hbm_to_vmem [thread:$0]  %s1, 256, %s27, [#allocation3], 128, 128, 8
    $region9: #{tpu_custom_call.1} parent=1 // pred_fallthru
      _
    // Predicated region
    $region10: #{tpu_custom_call.1} parent=1 // pred_check
      _
    $region11: #{tpu_custom_call.1} parent=1 // pred_check_branch
      %34 = sbr.rel (0) target = $region13
    $region12: #{tpu_custom_call.1} parent=1 // pred_region
      %s36 = ssub.s32 256, 256
      %37 = vsyncadd [#allocation8], %s36
      %s38 = sshll.u32 [#allocation7], 4
      %s39 = int_to_ptr.vmem [resolvable:$true] %s38
      %44 = dma.hbm_to_vmem [thread:$0]  %s2, 256, %s39, [#allocation8], 128, 128, 8
    $region13: #{tpu_custom_call.1} parent=1 // pred_fallthru
      _
    // Predicated region
    $region14: #{tpu_custom_call.1} parent=1 // pred_check
      _
    $region15: #{tpu_custom_call.1} parent=1 // pred_check_branch
      %46 = sbr.rel (0) target = $region17
    $region16: #{tpu_custom_call.1} parent=1 // pred_region
      %s48 = ssub.s32 256, 256
      %49 = vsyncadd [#allocation8], %s48
      %s50 = sshll.u32 [#allocation9], 4
      %s51 = int_to_ptr.vmem [resolvable:$true] %s50
      %56 = dma.hbm_to_vmem [thread:$0]  %s3, 256, %s51, [#allocation8], 128, 128, 8
    $region17: #{tpu_custom_call.1} parent=1 // pred_fallthru
      _
    // Predicated region
    $region18: #{tpu_custom_call.1} parent=1 // pred_check
      _
    $region19: #{tpu_custom_call.1} parent=1 // pred_check_branch
      %58 = sbr.rel (0) target = $region21
    $region20: #{tpu_custom_call.1} parent=1 // pred_region
      %59 = dma.done [#allocation5], 16
    $region21: #{tpu_custom_call.1} parent=1 // pred_fallthru
      _
    // Predicated region
    $region22: #{tpu_custom_call.1} parent=1 // pred_check
      _
    $region23: #{tpu_custom_call.1} parent=1 // pred_check_branch
      %61 = sbr.rel (0) target = $region25
    $region24: #{tpu_custom_call.1} parent=1 // pred_region
      %62 = dma.done [#allocation3], 256
    $region25: #{tpu_custom_call.1} parent=1 // pred_fallthru
      _
    // Predicated region
    $region26: #{tpu_custom_call.1} parent=1 // pred_check
      _
    $region27: #{tpu_custom_call.1} parent=1 // pred_check_branch
      %64 = sbr.rel (0) target = $region29
    $region28: #{tpu_custom_call.1} parent=1 // pred_region
      %65 = dma.done [#allocation8], 256
    $region29: #{tpu_custom_call.1} parent=1 // pred_fallthru
      _
    // Predicated region
    $region30: #{tpu_custom_call.1} parent=1 // pred_check
      _
    $region31: #{tpu_custom_call.1} parent=1 // pred_check_branch
      %67 = sbr.rel (0) target = $region33
    $region32: #{tpu_custom_call.1} parent=1 // pred_region
      %68 = dma.done [#allocation8], 256
    $region33: #{tpu_custom_call.1} parent=1 // pred_fallthru
      _
    %69 = sfence
    %s70 = sld [smem:[#allocation2]]
    %s71 = sld [smem:[#allocation2 + $0x1]]
    %v72 = vld [vmem:[#allocation9] sm:$0xff]
    %v73 = vld [vmem:[#allocation9 + $0x8] sm:$0xff]
    %vm74 = vcmp.eq.f32.partialorder %v72, 1.0
    %vm75 = vcmp.eq.f32.partialorder %v73, 1.0
    %v76 = vstv %s70
    %v77 = vsel %vm74, %v76, %v72
    %v78 = vsel %vm75, %v76, %v73
    %vm79 = vcmp.eq.f32.partialorder %v77, 0.0
    %vm80 = vcmp.eq.f32.partialorder %v78, 0.0
    %v81 = vstv %s71
    %v82 = vsel %vm79, %v81, %v77
    %v83 = vsel %vm80, %v81, %v78
    %v84 = vld [vmem:[#allocation7] sm:$0xff]
    %v85 = vld [vmem:[#allocation7 + $0x8] sm:$0xff]
    %v86 = vld [vmem:[#allocation6] sm:$0xff]
    %v87 = vld [vmem:[#allocation6 + $0x8] sm:$0xff]
    %v88 = vsub.f32 %v84, %v86
    %v89 = vsub.f32 %v85, %v87
    %v90 = vmul.f32 %v82, %v88
    %v91 = vmul.f32 %v83, %v89
    %v92 = vand.u32 2147483647, %v90
    %v93 = vand.u32 2147483647, %v91
    %s94 = smul.u32 0, 16
    %v95 = vlaneseq
    %v96 = vshrl.u32 %v95, 7
    %v97 = vadd.s32 %v96, 8
    %v98 = vstv %s94
    %v99 = vadd.s32 %v98, %v96
    %v100 = vadd.s32 %v98, %v97
    %vm101 = vcmp.lt.s32.totalorder %v99, 13
    %vm102 = vcmp.lt.s32.totalorder %v100, 13
    %v103 = vsel %vm101, %v92, 0.0
    %v104 = vsel %vm102, %v93, 0.0
    %vm105 = vcmask 654336
    %v106 = vsel %vm105, %v103, 0.0
    %v107 = vsel %vm105, %v104, 0.0
    %v108 = vadd.f32 %v106, %v107
    %109 = vst.msk [vmem:[#allocation10] sm:$0xff] %vm105, %v108
    // Predicated region
    $region34: #{tpu_custom_call.1} parent=1 // pred_check
      _
    $region35: #{tpu_custom_call.1} parent=1 // pred_check_branch
      %111 = sbr.rel (0) target = $region37
    $region36: #{tpu_custom_call.1} parent=1 // pred_region
      %s113 = ssub.s32 128, 128
      %114 = vsyncadd [#allocation4], %s113
      %s116 = sshll.u32 [#allocation10], 4
      %s117 = int_to_ptr.vmem [resolvable:$true] %s116
      %119 = dma.vmem_to_hbm [thread:$0]  %s117, 128, %s4, [#allocation4]
    $region37: #{tpu_custom_call.1} parent=1 // pred_fallthru
      _
    // Predicated region
    $region38: #{tpu_custom_call.1} parent=1 // pred_check
      _
    $region39: #{tpu_custom_call.1} parent=1 // pred_check_branch
      %121 = sbr.rel (0) target = $region41
    $region40: #{tpu_custom_call.1} parent=1 // pred_region
      %122 = dma.done [#allocation4], 128
    $region41: #{tpu_custom_call.1} parent=1 // pred_fallthru
      _
    %123 = vsyncpa [#allocation3], 1
    %124 = vsyncpa [#allocation8], 1
    %125 = vsyncpa [#allocation4], 1
    %126 = vsyncpa [#allocation5], 1

</llo_original>
